<compile_context>
chip_gen: v7x
topology: tpu7x:2x2x1
jax: 0.10.0
libtpu: 0.0.40
codegen_flags: <defaults>
</compile_context>

<pallas_src>
import math
import functools

import jax
import jax.numpy as jnp
from jax.experimental import pallas as pl
from jax.experimental.pallas import tpu as pltpu


def _gcn_kernel(feat_ref, adj_ref, w_ref, out_ref, acc_ref):
    # feat_ref: (tk, F_in)   adj_ref: (tm, tk)   w_ref: (F_in, F_out)
    # out_ref:  (tm, F_out)  acc_ref: VMEM (tm, F_out) float32
    k = pl.program_id(1)

    @pl.when(k == 0)
    def _():
        acc_ref[...] = jnp.zeros_like(acc_ref)

    # support tile for this K slice: (tk, F_out), f32 accumulation on the MXU.
    support = jnp.dot(feat_ref[...], w_ref[...],
                      preferred_element_type=jnp.float32)
    # Accumulate the adj row-tile contribution: (tm, tk) @ (tk, F_out).
    acc_ref[...] += jnp.dot(adj_ref[...], support,
                            preferred_element_type=jnp.float32)

    @pl.when(k == pl.num_programs(1) - 1)
    def _():
        out_ref[...] = acc_ref[...].astype(out_ref.dtype)
        # TODO(synk): bias=True / residual=True are simple epilogue adds
        # (+ bias row / + features tile); defaults in the spec are False.


def _pick_tile(dim: int, preferred: int) -> int:
    # 128/256-aligned tile when it divides evenly; otherwise take the full
    # extent (full-extent blocks are always legal w.r.t. the (8, 128) rule).
    if dim % preferred == 0:
        return preferred
    return dim


@functools.partial(jax.jit, static_argnames=("tm", "tk"))
def gcn_forward(features, adj, weight, *, tm=128, tk=128):
    """output = adj @ (features @ weight).

    features: [N, F_in], adj: [N, N], weight: [F_in, F_out] -> [N, F_out].
    tm/tk default to 128 (saturates v5e MXU, fine on v6e/v7x); pass 256 for
    large shapes on v6e/v7x to fill the 256x256 systolic array.
    """
    N, F_in = features.shape
    M, K = adj.shape
    F_out = weight.shape[1]
    assert K == N and weight.shape[0] == F_in

    tm = _pick_tile(M, min(tm, M))
    tk = _pick_tile(K, min(tk, K))
    grid = (M // tm, K // tk)

    return pl.pallas_call(
        _gcn_kernel,
        out_shape=jax.ShapeDtypeStruct((M, F_out), features.dtype),
        grid_spec=pltpu.PrefetchScalarGridSpec(
            num_scalar_prefetch=0,
            grid=grid,
            in_specs=[
                # features K-tile (contraction rows of the second matmul).
                pl.BlockSpec((tk, F_in), lambda i, k: (k, 0)),
                # adj (row tile, K tile) -- only a (tm, tk) slab in VMEM.
                pl.BlockSpec((tm, tk), lambda i, k: (i, k)),
                # Loop-invariant weight. NOTE: a constant index_map still
                # reserves two VMEM buffers; for very large F_in*F_out switch
                # to memory_space=pl.ANY + a one-shot DMA into VMEM scratch.
                pl.BlockSpec((F_in, F_out), lambda i, k: (0, 0)),
            ],
            out_specs=pl.BlockSpec((tm, F_out), lambda i, k: (i, 0)),
            scratch_shapes=[pltpu.VMEM((tm, F_out), jnp.float32)],
        ),
        compiler_params=pltpu.CompilerParams(
            # Row tiles are independent -> shard across v7x's 2 TensorCores.
            # K is a reduction (output block revisited) -> "arbitrary", last.
            dimension_semantics=("parallel", "arbitrary"),
        ),
    )(features, adj, weight)


def gcn_reference(features, adj, weight):
    support = jnp.dot(features, weight, precision=jax.lax.Precision.HIGHEST)
    return jnp.dot(adj, support, precision=jax.lax.Precision.HIGHEST)


if __name__ == "__main__":
    # Small but lane/sublane-dense shapes (128-aligned) consistent with a GCN
    # layer: N nodes, F_in -> F_out features.
    N, F_in, F_out = 256, 128, 128

    key = jax.random.PRNGKey(0)
    k_feat, k_adj, k_w = jax.random.split(key, 3)

    features = jax.random.normal(k_feat, (N, F_in), dtype=jnp.float32)
    adj = jax.random.normal(k_adj, (N, N), dtype=jnp.float32)

    # Mirrors reset_parameters: U(-stdv, stdv), stdv = 1/sqrt(out_features).
    stdv = 1.0 / math.sqrt(F_out)
    weight = jax.random.uniform(
        k_w, (F_in, F_out), dtype=jnp.float32, minval=-stdv, maxval=stdv
    )

    out = jax.block_until_ready(gcn_forward(features, adj, weight))
    ref = gcn_reference(features, adj, weight)

    assert out.shape == (N, F_out)
    rel_err = jnp.max(jnp.abs(out - ref)) / (jnp.max(jnp.abs(ref)) + 1e-6)
    assert rel_err < 1e-3, f"mismatch vs reference: rel_err={rel_err}"

    print("KERNEL_OK")
</pallas_src>

<mosaic_0001>
module attributes {stable_mosaic.version = 11 : i64} {
  func.func @_gcn_kernel(%arg0: i32, %arg1: i32, %arg2: memref<128x128xf32, #tpu.memory_space<vmem>>, %arg3: memref<128x128xf32, #tpu.memory_space<vmem>>, %arg4: memref<128x128xf32, #tpu.memory_space<vmem>>, %arg5: memref<128x128xf32, #tpu.memory_space<vmem>>, %arg6: memref<128x128xf32, #tpu.memory_space<vmem>>) attributes {dimension_semantics = [#tpu.dimension_semantics<parallel>, #tpu.dimension_semantics<arbitrary>], iteration_bounds = array<i64: 2, 2>, scalar_prefetch = 0 : i64, scratch_operands = 1 : i64, tpu.core_type = #tpu.core_type<tc>, window_params = [{transform_indices = @transform_0, window_bounds = array<i64: 128, 128>}, {transform_indices = @transform_1, window_bounds = array<i64: 128, 128>}, {pipeline_mode = #tpu.pipeline_mode<synchronous>, transform_indices = @transform_2, window_bounds = array<i64: 128, 128>}, {transform_indices = @transform_3, window_bounds = array<i64: 128, 128>}]} {
    %c0_i32 = arith.constant 0 : i32
    %0 = arith.cmpi eq, %arg1, %c0_i32 : i32
    %1 = arith.extui %0 : i1 to i32
    %c0_i32_0 = arith.constant 0 : i32
    %2 = arith.cmpi ne, %1, %c0_i32_0 : i32
    scf.if %2 {
      %cst_12 = arith.constant 0.000000e+00 : f32
      %14 = vector.broadcast %cst_12 : f32 to vector<128x128xf32>
      %c0_13 = arith.constant 0 : index
      %c0_14 = arith.constant 0 : index
      %15 = vector.load %arg6[%c0_13, %c0_14] : memref<128x128xf32, #tpu.memory_space<vmem>>, vector<128x128xf32>
      tpu.vector_store %arg6[%c0_13, %c0_14], %14 {strides = array<i32>} : memref<128x128xf32, #tpu.memory_space<vmem>>, vector<128x128xf32>,
    } else {
    }
    %c0 = arith.constant 0 : index
    %c0_1 = arith.constant 0 : index
    %3 = vector.load %arg2[%c0, %c0_1] : memref<128x128xf32, #tpu.memory_space<vmem>>, vector<128x128xf32>
    %c0_2 = arith.constant 0 : index
    %c0_3 = arith.constant 0 : index
    %4 = vector.load %arg4[%c0_2, %c0_3] : memref<128x128xf32, #tpu.memory_space<vmem>>, vector<128x128xf32>
    %cst = arith.constant dense<0.000000e+00> : vector<128x128xf32>
    %5 = tpu.matmul %3, %4, %cst {dimension_numbers = #tpu.dot_dimension_numbers<[1], [0], [0], [1], [0, 0, 1, 1], [], []>} : vector<128x128xf32>, vector<128x128xf32>, vector<128x128xf32> -> vector<128x128xf32>
    %c0_4 = arith.constant 0 : index
    %c0_5 = arith.constant 0 : index
    %6 = vector.load %arg6[%c0_4, %c0_5] : memref<128x128xf32, #tpu.memory_space<vmem>>, vector<128x128xf32>
    %c0_6 = arith.constant 0 : index
    %c0_7 = arith.constant 0 : index
    %7 = vector.load %arg3[%c0_6, %c0_7] : memref<128x128xf32, #tpu.memory_space<vmem>>, vector<128x128xf32>
    %cst_8 = arith.constant dense<0.000000e+00> : vector<128x128xf32>
    %8 = tpu.matmul %7, %5, %cst_8 {dimension_numbers = #tpu.dot_dimension_numbers<[1], [0], [0], [1], [0, 0, 1, 1], [], []>} : vector<128x128xf32>, vector<128x128xf32>, vector<128x128xf32> -> vector<128x128xf32>
    %9 = arith.addf %6, %8 : vector<128x128xf32>
    %c0_9 = arith.constant 0 : index
    %c0_10 = arith.constant 0 : index
    %10 = vector.load %arg6[%c0_9, %c0_10] : memref<128x128xf32, #tpu.memory_space<vmem>>, vector<128x128xf32>
    tpu.vector_store %arg6[%c0_9, %c0_10], %9 {strides = array<i32>} : memref<128x128xf32, #tpu.memory_space<vmem>>, vector<128x128xf32>,
    %c1_i32 = arith.constant 1 : i32
    %11 = arith.cmpi eq, %arg1, %c1_i32 : i32
    %12 = arith.extui %11 : i1 to i32
    %c0_i32_11 = arith.constant 0 : i32
    %13 = arith.cmpi ne, %12, %c0_i32_11 : i32
    scf.if %13 {
      %c0_12 = arith.constant 0 : index
      %c0_13 = arith.constant 0 : index
      %14 = vector.load %arg6[%c0_12, %c0_13] : memref<128x128xf32, #tpu.memory_space<vmem>>, vector<128x128xf32>
      %c0_14 = arith.constant 0 : index
      %c0_15 = arith.constant 0 : index
      %15 = vector.load %arg5[%c0_14, %c0_15] : memref<128x128xf32, #tpu.memory_space<vmem>>, vector<128x128xf32>
      tpu.vector_store %arg5[%c0_14, %c0_15], %14 {strides = array<i32>} : memref<128x128xf32, #tpu.memory_space<vmem>>, vector<128x128xf32>,
    } else {
    }
    return
  }
  func.func @transform_0(%arg0: i32, %arg1: i32) -> (i32, i32) {
    %c0_i32 = arith.constant 0 : i32
    %c0_i32_0 = arith.constant 0 : i32
    return %arg1, %c0_i32 : i32, i32
  }
  func.func @transform_1(%arg0: i32, %arg1: i32) -> (i32, i32) {
    %c0_i32 = arith.constant 0 : i32
    return %arg0, %arg1 : i32, i32
  }
  func.func @transform_2(%arg0: i32, %arg1: i32) -> (i32, i32) {
    %c0_i32 = arith.constant 0 : i32
    %c0_i32_0 = arith.constant 0 : i32
    %c0_i32_1 = arith.constant 0 : i32
    return %c0_i32, %c0_i32_0 : i32, i32
  }
  func.func @transform_3(%arg0: i32, %arg1: i32) -> (i32, i32) {
    %c0_i32 = arith.constant 0 : i32
    %c0_i32_0 = arith.constant 0 : i32
    return %arg0, %c0_i32 : i32, i32
  }
}

</mosaic_0001>

<llo_original>
// kernel: gcn_forward.1
$region0: #{gcn_forward.1}
  #allocation0 [shape = 'u32[]', space=smem, size = 0x4, offset = 0x4, fixed_abs, tag = 'smem constant byte address 0x4 - core index']
  #allocation1 [shape = 'u32[144,128]{1,0:T(1,128)}', space=vmem, size = 0x12000, scoped, tag = 'internal scratch']
  #allocation2 [shape = 'f32[128,128]{1,0:T(8,128)}', space=vmem, size = 0x10000, scoped, tag = 'scratch operand']
  %s0 = inlined_call_operand.hbm [shape: f32[256,128], index: 0, kind: input, shape index: {}]
  %s1 = inlined_call_operand.hbm [shape: f32[256,256], index: 1, kind: input, shape index: {}]
  %s2 = inlined_call_operand.hbm [shape: f32[128,128], index: 2, kind: input, shape index: {}]
  %s3 = inlined_call_operand.hbm [shape: f32[256,128], index: 3, kind: output, shape index: {}]
  %s4 = sld [smem:[#allocation0]]
  $region65: #{gcn_forward.1} parent=0
    _
  %s6 = ssub.s32 1, %s4
  %s7 = scalar_select 0, %s6, %s4
  $region1: #{gcn_forward.1} parent=0
    #allocation3 [shape = 'u8[131072]{0}', space=vmem, size = 0x20000, scoped, tag = 'input window, operand 0']
    #allocation4 [shape = 's32[2]{0}', space=sflag, size = 0x8, scoped, tag = 'scoped memory for gcn_forward.1']
    #allocation5 [shape = 's32[2]{0}', space=sflag, size = 0x8, scoped, tag = 'scoped memory for gcn_forward.1']
    #allocation6 [shape = 'u8[131072]{0}', space=vmem, size = 0x20000, scoped, tag = 'input window, operand 1']
    #allocation7 [shape = 's32[2]{0}', space=sflag, size = 0x8, scoped, tag = 'scoped memory for gcn_forward.1']
    #allocation8 [shape = 'u8[65536]{0}', space=vmem, size = 0x10000, scoped, tag = 'input window, operand 2, single buffered']
    #allocation9 [shape = 'u8[131072]{0}', space=vmem, size = 0x20000, scoped, tag = 'output window, operand 0']
    %8 = vsyncpa [#allocation4], 0
    %s9 = scalar_lea.sflag [#allocation4], 1
    %10 = vsyncpa %s9, 0
    %11 = vsyncpa [#allocation7], 0
    %s12 = scalar_lea.sflag [#allocation7], 1
    %13 = vsyncpa %s12, 0
    %14 = vsyncpa [#allocation5], 0
    %s15 = scalar_lea.sflag [#allocation5], 1
    %16 = vsyncpa %s15, 0
    loop: start=0, step=1, limit=6
    $region2: #{gcn_forward.1} parent=1 // loop_pre_header
      _
    $region3: #{gcn_forward.1} parent=1 // loop_header
      %s18 = sphi 0, %s22
      %p19 = scmp.ge.s32.totalorder %s18, 6
      %s25 = sphi 0, %s37
      %s26 = sphi 0, %s33
      %s27 = sphi 0, %s25
      %s28 = sphi 0, %s26
      %s29 = sphi 0, %s27
      %s30 = sphi 0, %s28
      %s40 = sphi 0, %s42
      %s43 = sphi 0, %s40
      %s44 = sphi 0, %s43
      %s60 = sphi 0, %s44
      %s68 = sphi 0, %s70
      %s71 = sphi 0, %s68
      %s72 = sphi 0, %s71
      %s88 = sphi 0, %s72
      %s92 = sphi 0, %s92
      %s94 = sphi 0, %s92
      %s95 = sphi 0, %s94
      %s109 = sphi 0, %s95
      %s115 = sphi 0, %s117
      %s118 = sphi 0, %s115
      %s119 = sphi 0, %s118
      %s135 = sphi 0, %s119
    $region4: #{gcn_forward.1} parent=1 // loop_header_branch
      %21 = sbr.rel (%p19) target = $region8
    $region5: #{gcn_forward.1} parent=1 // loop_body
      %s23 = ssub.s32 %s18, 1
      %s24 = ssub.s32 %s18, 2
      %s31 = sadd.s32 1, %s26
      %p32 = scmp.ge.s32.totalorder %s31, 2
      %s33 = scalar_select %p32, 0, %s31
      %s34 = sadd.s32 1, %s25
      %s35 = scalar_select %p32, %s34, %s25
      %p36 = scmp.ge.s32.totalorder %s35, 2
      %s37 = scalar_select %p36, 0, %s35
      %s38 = ssub.s32 %s26, %s33
      %p39 = scmp.eq.s32.totalorder %s38, 0
      %s41 = sadd.s32 %s40, 1
      %s42 = scalar_select %p39, %s40, %s41
      %p45 = pneg %p39
      %p46 = scmp.eq.s32.totalorder %s18, 3
      %p47 = por %p45, %p46
      %p48 = scmp.ne.s32.totalorder %s40, %s43
      %p49 = scmp.eq.s32.totalorder %s18, 0
      %p50 = por %p48, %p49
      %p51 = scmp.ne.s32.totalorder %s40, %s43
      %p52 = scmp.eq.s32.totalorder %s23, 3
      %p53 = por %p51, %p52
      %p54 = scmp.ne.s32.totalorder %s43, %s44
      %p55 = scmp.eq.s32.totalorder %s23, 0
      %p56 = por %p54, %p55
      %p57 = scmp.ne.s32.totalorder %s43, %s44
      %p58 = scmp.eq.s32.totalorder %s24, 3
      %p59 = por %p57, %p58
      %p61 = scmp.ne.s32.totalorder %s44, %s60
      %p62 = scmp.eq.s32.totalorder %s24, 0
      %p63 = por %p61, %p62
      %s64 = ssub.s32 %s25, %s37
      %s65 = ssub.s32 %s26, %s33
      %s66 = sor.u32 %s64, %s65
      %p67 = scmp.eq.s32.totalorder %s66, 0
      %s69 = sadd.s32 %s68, 1
      %s70 = scalar_select %p67, %s68, %s69
      %p73 = pneg %p67
      %p74 = scmp.eq.s32.totalorder %s18, 3
      %p75 = por %p73, %p74
      %p76 = scmp.ne.s32.totalorder %s68, %s71
      %p77 = scmp.eq.s32.totalorder %s18, 0
      %p78 = por %p76, %p77
      %p79 = scmp.ne.s32.totalorder %s68, %s71
      %p80 = scmp.eq.s32.totalorder %s23, 3
      %p81 = por %p79, %p80
      %p82 = scmp.ne.s32.totalorder %s71, %s72
      %p83 = scmp.eq.s32.totalorder %s23, 0
      %p84 = por %p82, %p83
      %p85 = scmp.ne.s32.totalorder %s71, %s72
      %p86 = scmp.eq.s32.totalorder %s24, 3
      %p87 = por %p85, %p86
      %p89 = scmp.ne.s32.totalorder %s72, %s88
      %p90 = scmp.eq.s32.totalorder %s24, 0
      %p91 = por %p89, %p90
      %s93 = sadd.s32 %s92, 1
      %p96 = scmp.eq.s32.totalorder %s18, 3
      %p97 = scmp.ne.s32.totalorder %s92, %s94
      %p98 = scmp.eq.s32.totalorder %s18, 0
      %p99 = por %p97, %p98
      %p100 = scmp.ne.s32.totalorder %s92, %s94
      %p101 = scmp.eq.s32.totalorder %s23, 3
      %p102 = por %p100, %p101
      %p103 = scmp.ne.s32.totalorder %s94, %s95
      %p104 = scmp.eq.s32.totalorder %s23, 0
      %p105 = por %p103, %p104
      %p106 = scmp.ne.s32.totalorder %s94, %s95
      %p107 = scmp.eq.s32.totalorder %s24, 3
      %p108 = por %p106, %p107
      %p110 = scmp.ne.s32.totalorder %s95, %s109
      %p111 = scmp.eq.s32.totalorder %s24, 0
      %p112 = por %p110, %p111
      %s113 = ssub.s32 %s25, %s37
      %p114 = scmp.eq.s32.totalorder %s113, 0
      %s116 = sadd.s32 %s115, 1
      %s117 = scalar_select %p114, %s115, %s116
      %p120 = pneg %p114
      %p121 = scmp.eq.s32.totalorder %s18, 3
      %p122 = por %p120, %p121
      %p123 = scmp.ne.s32.totalorder %s115, %s118
      %p124 = scmp.eq.s32.totalorder %s18, 0
      %p125 = por %p123, %p124
      %p126 = scmp.ne.s32.totalorder %s115, %s118
      %p127 = scmp.eq.s32.totalorder %s23, 3
      %p128 = por %p126, %p127
      %p129 = scmp.ne.s32.totalorder %s118, %s119
      %p130 = scmp.eq.s32.totalorder %s23, 0
      %p131 = por %p129, %p130
      %p132 = scmp.ne.s32.totalorder %s118, %s119
      %p133 = scmp.eq.s32.totalorder %s24, 3
      %p134 = por %p132, %p133
      %p136 = scmp.ne.s32.totalorder %s119, %s135
      %p137 = scmp.eq.s32.totalorder %s24, 0
      %p138 = por %p136, %p137
      %p139 = scmp.le.s32.totalorder 1, %s18
      %p140 = scmp.lt.s32.totalorder %s18, 5
      %p141 = pnand %p139, %p140
      %p142 = pneg %p141
      // Predicated region
      $region9: #{gcn_forward.1} parent=5 // pred_check
        _
      $region10: #{gcn_forward.1} parent=5 // pred_check_branch
        %144 = sbr.rel (%p141) target = $region12
      $region11: #{gcn_forward.1} parent=5 // pred_region
        %s145 = ssub.s32 %s18, 1
        // Predicated region
        $region13: #{gcn_forward.1} parent=11 // pred_check
          %p146 = pneg %p105
        $region14: #{gcn_forward.1} parent=11 // pred_check_branch
          %148 = sbr.rel (%p146) target = $region16
        $region15: #{gcn_forward.1} parent=11 // pred_region
          %s150 = ssub.s32 2048, 2048
          %151 = vsyncadd [#allocation7], %s150
          %s152 = sshll.u32 [#allocation8], 4
          %s153 = int_to_ptr.vmem [resolvable:$true] %s152
          %158 = dma.hbm_to_vmem [thread:$0]  %s2, 2048, %s153, [#allocation7], 128, 128, 8
        $region16: #{gcn_forward.1} parent=11 // pred_fallthru
          _
      $region12: #{gcn_forward.1} parent=5 // pred_fallthru
        _
      %p159 = scmp.lt.s32.totalorder %s18, 4
      // Predicated region
      $region17: #{gcn_forward.1} parent=5 // pred_check
        %p160 = pneg %p159
      $region18: #{gcn_forward.1} parent=5 // pred_check_branch
        %162 = sbr.rel (%p160) target = $region20
      $region19: #{gcn_forward.1} parent=5 // pred_region
        // Predicated region
        $region21: #{gcn_forward.1} parent=19 // pred_check
          %p163 = pneg %p50
        $region22: #{gcn_forward.1} parent=19 // pred_check_branch
          %165 = sbr.rel (%p163) target = $region24
        $region23: #{gcn_forward.1} parent=19 // pred_region
          %s166 = sand.u32 %s40, 1
          %s167 = scalar_lea.sflag [#allocation4], %s166
          %s168 = sand.u32 %s40, 1
          %s169 = smul.addr %s168, 128
          %s170 = scalar_lea.vmem [#allocation3], %s169
          %s171 = smul.u32 16, %s26
          %s173 = ssub.s32 2048, 2048
          %174 = vsyncadd %s167, %s173
          %s175 = smul.addr %s171, 128
          %s176 = scalar_lea.hbm %s0, %s175
          %s177 = sshll.u32 %s170, 4
          %s178 = int_to_ptr.vmem [resolvable:$true] %s177
          %183 = dma.hbm_to_vmem [thread:$0]  %s176, 2048, %s178, %s167, 128, 128, 8
        $region24: #{gcn_forward.1} parent=19 // pred_fallthru
          _
        // Predicated region
        $region25: #{gcn_forward.1} parent=19 // pred_check
          %p184 = pneg %p78
        $region26: #{gcn_forward.1} parent=19 // pred_check_branch
          %186 = sbr.rel (%p184) target = $region28
        $region27: #{gcn_forward.1} parent=19 // pred_region
          %s187 = sand.u32 %s18, 1
          %s188 = scalar_lea.sflag [#allocation7], %s187
          %s189 = sand.u32 %s68, 1
          %s190 = smul.addr %s189, 128
          %s191 = scalar_lea.vmem [#allocation6], %s190
          %s192 = smul.u32 16, %s25
          %s194 = ssub.s32 2048, 2048
          %195 = vsyncadd %s188, %s194
          %s196 = smul.addr %s192, 2
          %s197 = sadd.s32 %s26, %s196
          %s198 = smul.addr %s197, 128
          %s199 = scalar_lea.hbm %s1, %s198
          %s200 = sshll.u32 %s191, 4
          %s201 = int_to_ptr.vmem [resolvable:$true] %s200
          %206 = dma.hbm_to_vmem [thread:$0]  %s199, 2048, %s201, %s188, 256, 128, 8
        $region28: #{gcn_forward.1} parent=19 // pred_fallthru
          _
      $region20: #{gcn_forward.1} parent=5 // pred_fallthru
        _
      %p207 = scmp.le.s32.totalorder 1, %s18
      %p208 = scmp.lt.s32.totalorder %s18, 5
      %p209 = pnand %p207, %p208
      %p210 = pneg %p209
      // Predicated region
      $region29: #{gcn_forward.1} parent=5 // pred_check
        _
      $region30: #{gcn_forward.1} parent=5 // pred_check_branch
        %212 = sbr.rel (%p209) target = $region32
      $region31: #{gcn_forward.1} parent=5 // pred_region
        %s213 = ssub.s32 %s18, 1
        %s214 = sand.u32 %s43, 1
        %s215 = scalar_lea.sflag [#allocation4], %s214
        %s216 = sand.u32 %s43, 1
        %s217 = smul.addr %s216, 128
        %s218 = scalar_lea.vmem [#allocation3], %s217
        // Predicated region
        $region33: #{gcn_forward.1} parent=31 // pred_check
          %p219 = pneg %p56
        $region34: #{gcn_forward.1} parent=31 // pred_check_branch
          %221 = sbr.rel (%p219) target = $region36
        $region35: #{gcn_forward.1} parent=31 // pred_region
          %222 = dma.done %s215, 2048
        $region36: #{gcn_forward.1} parent=31 // pred_fallthru
          _
        %s223 = sand.u32 %s23, 1
        %s224 = scalar_lea.sflag [#allocation7], %s223
        %s225 = sand.u32 %s71, 1
        %s226 = smul.addr %s225, 128
        %s227 = scalar_lea.vmem [#allocation6], %s226
        // Predicated region
        $region37: #{gcn_forward.1} parent=31 // pred_check
          %p228 = pneg %p84
        $region38: #{gcn_forward.1} parent=31 // pred_check_branch
          %230 = sbr.rel (%p228) target = $region40
        $region39: #{gcn_forward.1} parent=31 // pred_region
          %231 = dma.done %s224, 2048
        $region40: #{gcn_forward.1} parent=31 // pred_fallthru
          _
        // Predicated region
        $region41: #{gcn_forward.1} parent=31 // pred_check
          %p232 = pneg %p105
        $region42: #{gcn_forward.1} parent=31 // pred_check_branch
          %234 = sbr.rel (%p232) target = $region44
        $region43: #{gcn_forward.1} parent=31 // pred_region
          %235 = dma.done [#allocation7], 2048
        $region44: #{gcn_forward.1} parent=31 // pred_fallthru
          _
        %s236 = sand.u32 %s43, 1
        %s237 = scalar_lea.sflag [#allocation4], %s236
        %s238 = sand.u32 %s43, 1
        %s239 = smul.addr %s238, 128
        %s240 = scalar_lea.vmem [#allocation3], %s239
        %p241 = pneg %p56
        %p242 = pneg %p53
        %s243 = sand.u32 %s23, 1
        %s244 = scalar_lea.sflag [#allocation7], %s243
        %s245 = sand.u32 %s71, 1
        %s246 = smul.addr %s245, 128
        %s247 = scalar_lea.vmem [#allocation6], %s246
        %p248 = pneg %p84
        %p249 = pneg %p81
        %p250 = pneg %p105
        %p251 = pneg %p102
        %p252 = pneg %p131
        %p253 = pneg %p128
        %s254 = sand.u32 %s118, 1
        %s255 = scalar_lea.sflag [#allocation5], %s254
        %s256 = sand.u32 %s118, 1
        %s257 = smul.addr %s256, 128
        %s258 = scalar_lea.vmem [#allocation9], %s257
        %s259 = smul.u32 16, %s28
        %s260 = smul.u32 16, %s27
        %s261 = smul.u32 16, %s27
        %p262 = scmp.eq.s32.totalorder %s28, 0
        // Predicated region
        $region45: #{gcn_forward.1} parent=31 // pred_check
          %p263 = pneg %p262
        $region46: #{gcn_forward.1} parent=31 // pred_check_branch
          %265 = sbr.rel (%p263) target = $region48
        $region47: #{gcn_forward.1} parent=31 // pred_region
          %266 = vst [vmem:[#allocation2] sm:$0xff] 0.0
          %267 = vst [vmem:[#allocation2 + $0x8] sm:$0xff] 0.0
          %268 = vst [vmem:[#allocation2 + $0x10] sm:$0xff] 0.0
          %269 = vst [vmem:[#allocation2 + $0x18] sm:$0xff] 0.0
          %270 = vst [vmem:[#allocation2 + $0x20] sm:$0xff] 0.0
          %271 = vst [vmem:[#allocation2 + $0x28] sm:$0xff] 0.0
          %272 = vst [vmem:[#allocation2 + $0x30] sm:$0xff] 0.0
          %273 = vst [vmem:[#allocation2 + $0x38] sm:$0xff] 0.0
          %274 = vst [vmem:[#allocation2 + $0x40] sm:$0xff] 0.0
          %275 = vst [vmem:[#allocation2 + $0x48] sm:$0xff] 0.0
          %276 = vst [vmem:[#allocation2 + $0x50] sm:$0xff] 0.0
          %277 = vst [vmem:[#allocation2 + $0x58] sm:$0xff] 0.0
          %278 = vst [vmem:[#allocation2 + $0x60] sm:$0xff] 0.0
          %279 = vst [vmem:[#allocation2 + $0x68] sm:$0xff] 0.0
          %280 = vst [vmem:[#allocation2 + $0x70] sm:$0xff] 0.0
          %281 = vst [vmem:[#allocation2 + $0x78] sm:$0xff] 0.0
        $region48: #{gcn_forward.1} parent=31 // pred_fallthru
          _
        %v282 = vld [vmem:[%s218] sm:$0xff]
        %v283 = vld [vmem:[%s218 + $0x8] sm:$0xff]
        %v284 = vld [vmem:[%s218 + $0x10] sm:$0xff]
        %v285 = vld [vmem:[%s218 + $0x18] sm:$0xff]
        %v286 = vld [vmem:[%s218 + $0x20] sm:$0xff]
        %v287 = vld [vmem:[%s218 + $0x28] sm:$0xff]
        %v288 = vld [vmem:[%s218 + $0x30] sm:$0xff]
        %v289 = vld [vmem:[%s218 + $0x38] sm:$0xff]
        %v290 = vld [vmem:[%s218 + $0x40] sm:$0xff]
        %v291 = vld [vmem:[%s218 + $0x48] sm:$0xff]
        %v292 = vld [vmem:[%s218 + $0x50] sm:$0xff]
        %v293 = vld [vmem:[%s218 + $0x58] sm:$0xff]
        %v294 = vld [vmem:[%s218 + $0x60] sm:$0xff]
        %v295 = vld [vmem:[%s218 + $0x68] sm:$0xff]
        %v296 = vld [vmem:[%s218 + $0x70] sm:$0xff]
        %v297 = vld [vmem:[%s218 + $0x78] sm:$0xff]
        %v298 = vld [vmem:[#allocation8] sm:$0xff]
        %v299 = vld [vmem:[#allocation8 + $0x8] sm:$0xff]
        %v300 = vld [vmem:[#allocation8 + $0x10] sm:$0xff]
        %v301 = vld [vmem:[#allocation8 + $0x18] sm:$0xff]
        %v302 = vld [vmem:[#allocation8 + $0x20] sm:$0xff]
        %v303 = vld [vmem:[#allocation8 + $0x28] sm:$0xff]
        %v304 = vld [vmem:[#allocation8 + $0x30] sm:$0xff]
        %v305 = vld [vmem:[#allocation8 + $0x38] sm:$0xff]
        %v306 = vld [vmem:[#allocation8 + $0x40] sm:$0xff]
        %v307 = vld [vmem:[#allocation8 + $0x48] sm:$0xff]
        %v308 = vld [vmem:[#allocation8 + $0x50] sm:$0xff]
        %v309 = vld [vmem:[#allocation8 + $0x58] sm:$0xff]
        %v310 = vld [vmem:[#allocation8 + $0x60] sm:$0xff]
        %v311 = vld [vmem:[#allocation8 + $0x68] sm:$0xff]
        %v312 = vld [vmem:[#allocation8 + $0x70] sm:$0xff]
        %v313 = vld [vmem:[#allocation8 + $0x78] sm:$0xff]
        %314 = vmatprep.subr.mxu0 0.0
        %315 = vmatpush1.msra.mxu0 %v298
        %316 = vmatprep.subr.mxu0 0.0
        %317 = vmatpush1.msra.mxu0 %v299
        %318 = vmatprep.subr.mxu0 0.0
        %319 = vmatpush1.msra.mxu0 %v300
        %320 = vmatprep.subr.mxu0 0.0
        %321 = vmatpush1.msra.mxu0 %v301
        %322 = vmatprep.subr.mxu0 0.0
        %323 = vmatpush1.msra.mxu0 %v302
        %324 = vmatprep.subr.mxu0 0.0
        %325 = vmatpush1.msra.mxu0 %v303
        %326 = vmatprep.subr.mxu0 0.0
        %327 = vmatpush1.msra.mxu0 %v304
        %328 = vmatprep.subr.mxu0 0.0
        %329 = vmatpush1.msra.mxu0 %v305
        %330 = vmatprep.subr.mxu0 0.0
        %331 = vmatpush1.msra.mxu0 %v306
        %332 = vmatprep.subr.mxu0 0.0
        %333 = vmatpush1.msra.mxu0 %v307
        %334 = vmatprep.subr.mxu0 0.0
        %335 = vmatpush1.msra.mxu0 %v308
        %336 = vmatprep.subr.mxu0 0.0
        %337 = vmatpush1.msra.mxu0 %v309
        %338 = vmatprep.subr.mxu0 0.0
        %339 = vmatpush1.msra.mxu0 %v310
        %340 = vmatprep.subr.mxu0 0.0
        %341 = vmatpush1.msra.mxu0 %v311
        %342 = vmatprep.subr.mxu0 0.0
        %343 = vmatpush1.msra.mxu0 %v312
        %344 = vmatprep.subr.mxu0 0.0
        %345 = vmatpush1.msra.mxu0 %v313
        %346 = vmatprep.subr.mxu0 0.0
        %347 = vmatpush1.msra.mxu0 0.0
        %348 = vmatprep.subr.mxu0 0.0
        %349 = vmatpush1.msra.mxu0 0.0
        %350 = vmatprep.subr.mxu0 0.0
        %351 = vmatpush1.msra.mxu0 0.0
        %352 = vmatprep.subr.mxu0 0.0
        %353 = vmatpush1.msra.mxu0 0.0
        %354 = vmatprep.subr.mxu0 0.0
        %355 = vmatpush1.msra.mxu0 0.0
        %356 = vmatprep.subr.mxu0 0.0
        %357 = vmatpush1.msra.mxu0 0.0
        %358 = vmatprep.subr.mxu0 0.0
        %359 = vmatpush1.msra.mxu0 0.0
        %360 = vmatprep.subr.mxu0 0.0
        %361 = vmatpush1.msra.mxu0 0.0
        %362 = vmatprep.subr.mxu0 0.0
        %363 = vmatpush1.msra.mxu0 0.0
        %364 = vmatprep.subr.mxu0 0.0
        %365 = vmatpush1.msra.mxu0 0.0
        %366 = vmatprep.subr.mxu0 0.0
        %367 = vmatpush1.msra.mxu0 0.0
        %368 = vmatprep.subr.mxu0 0.0
        %369 = vmatpush1.msra.mxu0 0.0
        %370 = vmatprep.subr.mxu0 0.0
        %371 = vmatpush1.msra.mxu0 0.0
        %372 = vmatprep.subr.mxu0 0.0
        %373 = vmatpush1.msra.mxu0 0.0
        %374 = vmatprep.subr.mxu0 0.0
        %375 = vmatpush1.msra.mxu0 0.0
        %376 = vmatprep.subr.mxu0 0.0
        %377 = vmatpush1.msra.mxu0 0.0
        %378 = vmatprep.mubr.f32.mxu0 0.0
        %379 = vmatmul.mubr.f32.gmra.mrb[0].mxu0 %v282
        %v380 = vpop.f32.mrb[0].mxu0
        %v381 = vadd.f32 0.0, %v380
        %v382 = vpop.f32.mrb[0].mxu0
        %383 = vmatprep.mubr.f32.mxu0 0.0
        %384 = vmatmul.mubr.f32.gmra.mrb[0].mxu0 %v283
        %v385 = vpop.f32.mrb[0].mxu0
        %v386 = vadd.f32 0.0, %v385
        %v387 = vpop.f32.mrb[0].mxu0
        %388 = vmatprep.mubr.f32.mxu0 0.0
        %389 = vmatmul.mubr.f32.gmra.mrb[0].mxu0 %v284
        %v390 = vpop.f32.mrb[0].mxu0
        %v391 = vadd.f32 0.0, %v390
        %v392 = vpop.f32.mrb[0].mxu0
        %393 = vmatprep.mubr.f32.mxu0 0.0
        %394 = vmatmul.mubr.f32.gmra.mrb[0].mxu0 %v285
        %v395 = vpop.f32.mrb[0].mxu0
        %v396 = vadd.f32 0.0, %v395
        %v397 = vpop.f32.mrb[0].mxu0
        %398 = vmatprep.mubr.f32.mxu0 0.0
        %399 = vmatmul.mubr.f32.gmra.mrb[0].mxu0 %v286
        %v400 = vpop.f32.mrb[0].mxu0
        %v401 = vadd.f32 0.0, %v400
        %v402 = vpop.f32.mrb[0].mxu0
        %403 = vmatprep.mubr.f32.mxu0 0.0
        %404 = vmatmul.mubr.f32.gmra.mrb[0].mxu0 %v287
        %v405 = vpop.f32.mrb[0].mxu0
        %v406 = vadd.f32 0.0, %v405
        %v407 = vpop.f32.mrb[0].mxu0
        %408 = vmatprep.mubr.f32.mxu0 0.0
        %409 = vmatmul.mubr.f32.gmra.mrb[0].mxu0 %v288
        %v410 = vpop.f32.mrb[0].mxu0
        %v411 = vadd.f32 0.0, %v410
        %v412 = vpop.f32.mrb[0].mxu0
        %413 = vmatprep.mubr.f32.mxu0 0.0
        %414 = vmatmul.mubr.f32.gmra.mrb[0].mxu0 %v289
        %v415 = vpop.f32.mrb[0].mxu0
        %v416 = vadd.f32 0.0, %v415
        %v417 = vpop.f32.mrb[0].mxu0
        %418 = vmatprep.mubr.f32.mxu0 0.0
        %419 = vmatmul.mubr.f32.gmra.mrb[0].mxu0 %v290
        %v420 = vpop.f32.mrb[0].mxu0
        %v421 = vadd.f32 0.0, %v420
        %v422 = vpop.f32.mrb[0].mxu0
        %423 = vmatprep.mubr.f32.mxu0 0.0
        %424 = vmatmul.mubr.f32.gmra.mrb[0].mxu0 %v291
        %v425 = vpop.f32.mrb[0].mxu0
        %v426 = vadd.f32 0.0, %v425
        %v427 = vpop.f32.mrb[0].mxu0
        %428 = vmatprep.mubr.f32.mxu0 0.0
        %429 = vmatmul.mubr.f32.gmra.mrb[0].mxu0 %v292
        %v430 = vpop.f32.mrb[0].mxu0
        %v431 = vadd.f32 0.0, %v430
        %v432 = vpop.f32.mrb[0].mxu0
        %433 = vmatprep.mubr.f32.mxu0 0.0
        %434 = vmatmul.mubr.f32.gmra.mrb[0].mxu0 %v293
        %v435 = vpop.f32.mrb[0].mxu0
        %v436 = vadd.f32 0.0, %v435
        %v437 = vpop.f32.mrb[0].mxu0
        %438 = vmatprep.mubr.f32.mxu0 0.0
        %439 = vmatmul.mubr.f32.gmra.mrb[0].mxu0 %v294
        %v440 = vpop.f32.mrb[0].mxu0
        %v441 = vadd.f32 0.0, %v440
        %v442 = vpop.f32.mrb[0].mxu0
        %443 = vmatprep.mubr.f32.mxu0 0.0
        %444 = vmatmul.mubr.f32.gmra.mrb[0].mxu0 %v295
        %v445 = vpop.f32.mrb[0].mxu0
        %v446 = vadd.f32 0.0, %v445
        %v447 = vpop.f32.mrb[0].mxu0
        %448 = vmatprep.mubr.f32.mxu0 0.0
        %449 = vmatmul.mubr.f32.gmra.mrb[0].mxu0 %v296
        %v450 = vpop.f32.mrb[0].mxu0
        %v451 = vadd.f32 0.0, %v450
        %v452 = vpop.f32.mrb[0].mxu0
        %453 = vmatprep.mubr.f32.mxu0 0.0
        %454 = vmatmul.mubr.f32.gmra.mrb[0].mxu0 %v297
        %v455 = vpop.f32.mrb[0].mxu0
        %v456 = vadd.f32 0.0, %v455
        %v457 = vpop.f32.mrb[0].mxu0
        %458 = vdwg.mxu0
        %v459 = vld [vmem:[#allocation2] sm:$0xff]
        %v460 = vld [vmem:[#allocation2 + $0x8] sm:$0xff]
        %v461 = vld [vmem:[#allocation2 + $0x10] sm:$0xff]
        %v462 = vld [vmem:[#allocation2 + $0x18] sm:$0xff]
        %v463 = vld [vmem:[#allocation2 + $0x20] sm:$0xff]
        %v464 = vld [vmem:[#allocation2 + $0x28] sm:$0xff]
        %v465 = vld [vmem:[#allocation2 + $0x30] sm:$0xff]
        %v466 = vld [vmem:[#allocation2 + $0x38] sm:$0xff]
        %v467 = vld [vmem:[#allocation2 + $0x40] sm:$0xff]
        %v468 = vld [vmem:[#allocation2 + $0x48] sm:$0xff]
        %v469 = vld [vmem:[#allocation2 + $0x50] sm:$0xff]
        %v470 = vld [vmem:[#allocation2 + $0x58] sm:$0xff]
        %v471 = vld [vmem:[#allocation2 + $0x60] sm:$0xff]
        %v472 = vld [vmem:[#allocation2 + $0x68] sm:$0xff]
        %v473 = vld [vmem:[#allocation2 + $0x70] sm:$0xff]
        %v474 = vld [vmem:[#allocation2 + $0x78] sm:$0xff]
        %v475 = vld [vmem:[%s227] sm:$0xff]
        %v476 = vld [vmem:[%s227 + $0x8] sm:$0xff]
        %v477 = vld [vmem:[%s227 + $0x10] sm:$0xff]
        %v478 = vld [vmem:[%s227 + $0x18] sm:$0xff]
        %v479 = vld [vmem:[%s227 + $0x20] sm:$0xff]
        %v480 = vld [vmem:[%s227 + $0x28] sm:$0xff]
        %v481 = vld [vmem:[%s227 + $0x30] sm:$0xff]
        %v482 = vld [vmem:[%s227 + $0x38] sm:$0xff]
        %v483 = vld [vmem:[%s227 + $0x40] sm:$0xff]
        %v484 = vld [vmem:[%s227 + $0x48] sm:$0xff]
        %v485 = vld [vmem:[%s227 + $0x50] sm:$0xff]
        %v486 = vld [vmem:[%s227 + $0x58] sm:$0xff]
        %v487 = vld [vmem:[%s227 + $0x60] sm:$0xff]
        %v488 = vld [vmem:[%s227 + $0x68] sm:$0xff]
        %v489 = vld [vmem:[%s227 + $0x70] sm:$0xff]
        %v490 = vld [vmem:[%s227 + $0x78] sm:$0xff]
        %491 = vmatprep.subr.mxu0 0.0
        %492 = vmatpush1.msra.mxu0 %v381
        %493 = vmatprep.subr.mxu0 0.0
        %494 = vmatpush1.msra.mxu0 %v386
        %495 = vmatprep.subr.mxu0 0.0
        %496 = vmatpush1.msra.mxu0 %v391
        %497 = vmatprep.subr.mxu0 0.0
        %498 = vmatpush1.msra.mxu0 %v396
        %499 = vmatprep.subr.mxu0 0.0
        %500 = vmatpush1.msra.mxu0 %v401
        %501 = vmatprep.subr.mxu0 0.0
        %502 = vmatpush1.msra.mxu0 %v406
        %503 = vmatprep.subr.mxu0 0.0
        %504 = vmatpush1.msra.mxu0 %v411
        %505 = vmatprep.subr.mxu0 0.0
        %506 = vmatpush1.msra.mxu0 %v416
        %507 = vmatprep.subr.mxu0 0.0
        %508 = vmatpush1.msra.mxu0 %v421
        %509 = vmatprep.subr.mxu0 0.0
        %510 = vmatpush1.msra.mxu0 %v426
        %511 = vmatprep.subr.mxu0 0.0
        %512 = vmatpush1.msra.mxu0 %v431
        %513 = vmatprep.subr.mxu0 0.0
        %514 = vmatpush1.msra.mxu0 %v436
        %515 = vmatprep.subr.mxu0 0.0
        %516 = vmatpush1.msra.mxu0 %v441
        %517 = vmatprep.subr.mxu0 0.0
        %518 = vmatpush1.msra.mxu0 %v446
        %519 = vmatprep.subr.mxu0 0.0
        %520 = vmatpush1.msra.mxu0 %v451
        %521 = vmatprep.subr.mxu0 0.0
        %522 = vmatpush1.msra.mxu0 %v456
        %523 = vmatprep.subr.mxu0 0.0
        %524 = vmatpush1.msra.mxu0 0.0
        %525 = vmatprep.subr.mxu0 0.0
        %526 = vmatpush1.msra.mxu0 0.0
        %527 = vmatprep.subr.mxu0 0.0
        %528 = vmatpush1.msra.mxu0 0.0
        %529 = vmatprep.subr.mxu0 0.0
        %530 = vmatpush1.msra.mxu0 0.0
        %531 = vmatprep.subr.mxu0 0.0
        %532 = vmatpush1.msra.mxu0 0.0
        %533 = vmatprep.subr.mxu0 0.0
        %534 = vmatpush1.msra.mxu0 0.0
        %535 = vmatprep.subr.mxu0 0.0
        %536 = vmatpush1.msra.mxu0 0.0
        %537 = vmatprep.subr.mxu0 0.0
        %538 = vmatpush1.msra.mxu0 0.0
        %539 = vmatprep.subr.mxu0 0.0
        %540 = vmatpush1.msra.mxu0 0.0
        %541 = vmatprep.subr.mxu0 0.0
        %542 = vmatpush1.msra.mxu0 0.0
        %543 = vmatprep.subr.mxu0 0.0
        %544 = vmatpush1.msra.mxu0 0.0
        %545 = vmatprep.subr.mxu0 0.0
        %546 = vmatpush1.msra.mxu0 0.0
        %547 = vmatprep.subr.mxu0 0.0
        %548 = vmatpush1.msra.mxu0 0.0
        %549 = vmatprep.subr.mxu0 0.0
        %550 = vmatpush1.msra.mxu0 0.0
        %551 = vmatprep.subr.mxu0 0.0
        %552 = vmatpush1.msra.mxu0 0.0
        %553 = vmatprep.subr.mxu0 0.0
        %554 = vmatpush1.msra.mxu0 0.0
        %555 = vmatprep.mubr.f32.mxu0 0.0
        %556 = vmatmul.mubr.f32.gmra.mrb[0].mxu0 %v475
        %v557 = vpop.f32.mrb[0].mxu0
        %v558 = vadd.f32 0.0, %v557
        %v559 = vpop.f32.mrb[0].mxu0
        %560 = vmatprep.mubr.f32.mxu0 0.0
        %561 = vmatmul.mubr.f32.gmra.mrb[0].mxu0 %v476
        %v562 = vpop.f32.mrb[0].mxu0
        %v563 = vadd.f32 0.0, %v562
        %v564 = vpop.f32.mrb[0].mxu0
        %565 = vmatprep.mubr.f32.mxu0 0.0
        %566 = vmatmul.mubr.f32.gmra.mrb[0].mxu0 %v477
        %v567 = vpop.f32.mrb[0].mxu0
        %v568 = vadd.f32 0.0, %v567
        %v569 = vpop.f32.mrb[0].mxu0
        %570 = vmatprep.mubr.f32.mxu0 0.0
        %571 = vmatmul.mubr.f32.gmra.mrb[0].mxu0 %v478
        %v572 = vpop.f32.mrb[0].mxu0
        %v573 = vadd.f32 0.0, %v572
        %v574 = vpop.f32.mrb[0].mxu0
        %575 = vmatprep.mubr.f32.mxu0 0.0
        %576 = vmatmul.mubr.f32.gmra.mrb[0].mxu0 %v479
        %v577 = vpop.f32.mrb[0].mxu0
        %v578 = vadd.f32 0.0, %v577
        %v579 = vpop.f32.mrb[0].mxu0
        %580 = vmatprep.mubr.f32.mxu0 0.0
        %581 = vmatmul.mubr.f32.gmra.mrb[0].mxu0 %v480
        %v582 = vpop.f32.mrb[0].mxu0
        %v583 = vadd.f32 0.0, %v582
        %v584 = vpop.f32.mrb[0].mxu0
        %585 = vmatprep.mubr.f32.mxu0 0.0
        %586 = vmatmul.mubr.f32.gmra.mrb[0].mxu0 %v481
        %v587 = vpop.f32.mrb[0].mxu0
        %v588 = vadd.f32 0.0, %v587
        %v589 = vpop.f32.mrb[0].mxu0
        %590 = vmatprep.mubr.f32.mxu0 0.0
        %591 = vmatmul.mubr.f32.gmra.mrb[0].mxu0 %v482
        %v592 = vpop.f32.mrb[0].mxu0
        %v593 = vadd.f32 0.0, %v592
        %v594 = vpop.f32.mrb[0].mxu0
        %595 = vmatprep.mubr.f32.mxu0 0.0
        %596 = vmatmul.mubr.f32.gmra.mrb[0].mxu0 %v483
        %v597 = vpop.f32.mrb[0].mxu0
        %v598 = vadd.f32 0.0, %v597
        %v599 = vpop.f32.mrb[0].mxu0
        %600 = vmatprep.mubr.f32.mxu0 0.0
        %601 = vmatmul.mubr.f32.gmra.mrb[0].mxu0 %v484
        %v602 = vpop.f32.mrb[0].mxu0
        %v603 = vadd.f32 0.0, %v602
        %v604 = vpop.f32.mrb[0].mxu0
        %605 = vmatprep.mubr.f32.mxu0 0.0
        %606 = vmatmul.mubr.f32.gmra.mrb[0].mxu0 %v485
        %v607 = vpop.f32.mrb[0].mxu0
        %v608 = vadd.f32 0.0, %v607
        %v609 = vpop.f32.mrb[0].mxu0
        %610 = vmatprep.mubr.f32.mxu0 0.0
        %611 = vmatmul.mubr.f32.gmra.mrb[0].mxu0 %v486
        %v612 = vpop.f32.mrb[0].mxu0
        %v613 = vadd.f32 0.0, %v612
        %v614 = vpop.f32.mrb[0].mxu0
        %615 = vmatprep.mubr.f32.mxu0 0.0
        %616 = vmatmul.mubr.f32.gmra.mrb[0].mxu0 %v487
        %v617 = vpop.f32.mrb[0].mxu0
        %v618 = vadd.f32 0.0, %v617
        %v619 = vpop.f32.mrb[0].mxu0
        %620 = vmatprep.mubr.f32.mxu0 0.0
        %621 = vmatmul.mubr.f32.gmra.mrb[0].mxu0 %v488
        %v622 = vpop.f32.mrb[0].mxu0
        %v623 = vadd.f32 0.0, %v622
        %v624 = vpop.f32.mrb[0].mxu0
        %625 = vmatprep.mubr.f32.mxu0 0.0
        %626 = vmatmul.mubr.f32.gmra.mrb[0].mxu0 %v489
        %v627 = vpop.f32.mrb[0].mxu0
        %v628 = vadd.f32 0.0, %v627
        %v629 = vpop.f32.mrb[0].mxu0
        %630 = vmatprep.mubr.f32.mxu0 0.0
        %631 = vmatmul.mubr.f32.gmra.mrb[0].mxu0 %v490
        %v632 = vpop.f32.mrb[0].mxu0
        %v633 = vadd.f32 0.0, %v632
        %v634 = vpop.f32.mrb[0].mxu0
        %635 = vdwg.mxu0
        %v636 = vadd.f32 %v459, %v558
        %v637 = vadd.f32 %v460, %v563
        %v638 = vadd.f32 %v461, %v568
        %v639 = vadd.f32 %v462, %v573
        %v640 = vadd.f32 %v463, %v578
        %v641 = vadd.f32 %v464, %v583
        %v642 = vadd.f32 %v465, %v588
        %v643 = vadd.f32 %v466, %v593
        %v644 = vadd.f32 %v467, %v598
        %v645 = vadd.f32 %v468, %v603
        %v646 = vadd.f32 %v469, %v608
        %v647 = vadd.f32 %v470, %v613
        %v648 = vadd.f32 %v471, %v618
        %v649 = vadd.f32 %v472, %v623
        %v650 = vadd.f32 %v473, %v628
        %v651 = vadd.f32 %v474, %v633
        %652 = vst [vmem:[#allocation2] sm:$0xff] %v636
        %653 = vst [vmem:[#allocation2 + $0x8] sm:$0xff] %v637
        %654 = vst [vmem:[#allocation2 + $0x10] sm:$0xff] %v638
        %655 = vst [vmem:[#allocation2 + $0x18] sm:$0xff] %v639
        %656 = vst [vmem:[#allocation2 + $0x20] sm:$0xff] %v640
        %657 = vst [vmem:[#allocation2 + $0x28] sm:$0xff] %v641
        %658 = vst [vmem:[#allocation2 + $0x30] sm:$0xff] %v642
        %659 = vst [vmem:[#allocation2 + $0x38] sm:$0xff] %v643
        %660 = vst [vmem:[#allocation2 + $0x40] sm:$0xff] %v644
        %661 = vst [vmem:[#allocation2 + $0x48] sm:$0xff] %v645
        %662 = vst [vmem:[#allocation2 + $0x50] sm:$0xff] %v646
        %663 = vst [vmem:[#allocation2 + $0x58] sm:$0xff] %v647
        %664 = vst [vmem:[#allocation2 + $0x60] sm:$0xff] %v648
        %665 = vst [vmem:[#allocation2 + $0x68] sm:$0xff] %v649
        %666 = vst [vmem:[#allocation2 + $0x70] sm:$0xff] %v650
        %667 = vst [vmem:[#allocation2 + $0x78] sm:$0xff] %v651
        %p668 = scmp.eq.s32.totalorder %s28, 1
        // Predicated region
        $region49: #{gcn_forward.1} parent=31 // pred_check
          %p669 = pneg %p668
        $region50: #{gcn_forward.1} parent=31 // pred_check_branch
          %671 = sbr.rel (%p669) target = $region52
        $region51: #{gcn_forward.1} parent=31 // pred_region
          %v672 = vld [vmem:[#allocation2] sm:$0xff]
          %v673 = vld [vmem:[#allocation2 + $0x8] sm:$0xff]
          %v674 = vld [vmem:[#allocation2 + $0x10] sm:$0xff]
          %v675 = vld [vmem:[#allocation2 + $0x18] sm:$0xff]
          %v676 = vld [vmem:[#allocation2 + $0x20] sm:$0xff]
          %v677 = vld [vmem:[#allocation2 + $0x28] sm:$0xff]
          %v678 = vld [vmem:[#allocation2 + $0x30] sm:$0xff]
          %v679 = vld [vmem:[#allocation2 + $0x38] sm:$0xff]
          %v680 = vld [vmem:[#allocation2 + $0x40] sm:$0xff]
          %v681 = vld [vmem:[#allocation2 + $0x48] sm:$0xff]
          %v682 = vld [vmem:[#allocation2 + $0x50] sm:$0xff]
          %v683 = vld [vmem:[#allocation2 + $0x58] sm:$0xff]
          %v684 = vld [vmem:[#allocation2 + $0x60] sm:$0xff]
          %v685 = vld [vmem:[#allocation2 + $0x68] sm:$0xff]
          %v686 = vld [vmem:[#allocation2 + $0x70] sm:$0xff]
          %v687 = vld [vmem:[#allocation2 + $0x78] sm:$0xff]
          %688 = vst [vmem:[%s258] sm:$0xff] %v672
          %689 = vst [vmem:[%s258 + $0x8] sm:$0xff] %v673
          %690 = vst [vmem:[%s258 + $0x10] sm:$0xff] %v674
          %691 = vst [vmem:[%s258 + $0x18] sm:$0xff] %v675
          %692 = vst [vmem:[%s258 + $0x20] sm:$0xff] %v676
          %693 = vst [vmem:[%s258 + $0x28] sm:$0xff] %v677
          %694 = vst [vmem:[%s258 + $0x30] sm:$0xff] %v678
          %695 = vst [vmem:[%s258 + $0x38] sm:$0xff] %v679
          %696 = vst [vmem:[%s258 + $0x40] sm:$0xff] %v680
          %697 = vst [vmem:[%s258 + $0x48] sm:$0xff] %v681
          %698 = vst [vmem:[%s258 + $0x50] sm:$0xff] %v682
          %699 = vst [vmem:[%s258 + $0x58] sm:$0xff] %v683
          %700 = vst [vmem:[%s258 + $0x60] sm:$0xff] %v684
          %701 = vst [vmem:[%s258 + $0x68] sm:$0xff] %v685
          %702 = vst [vmem:[%s258 + $0x70] sm:$0xff] %v686
          %703 = vst [vmem:[%s258 + $0x78] sm:$0xff] %v687
        $region52: #{gcn_forward.1} parent=31 // pred_fallthru
          _
        %s704 = sand.u32 %s118, 1
        %s705 = scalar_lea.sflag [#allocation5], %s704
        %s706 = sand.u32 %s118, 1
        %s707 = smul.addr %s706, 128
        %s708 = scalar_lea.vmem [#allocation9], %s707
        // Predicated region
        $region53: #{gcn_forward.1} parent=31 // pred_check
          %p709 = pneg %p128
        $region54: #{gcn_forward.1} parent=31 // pred_check_branch
          %711 = sbr.rel (%p709) target = $region56
        $region55: #{gcn_forward.1} parent=31 // pred_region
          %s712 = smul.u32 16, %s27
          %s714 = ssub.s32 2048, 2048
          %715 = vsyncadd %s705, %s714
          %s716 = smul.addr %s712, 128
          %s717 = scalar_lea.hbm %s3, %s716
          %s718 = sshll.u32 %s708, 4
          %s719 = int_to_ptr.vmem [resolvable:$true] %s718
          %724 = dma.vmem_to_hbm [thread:$0]  %s719, 2048, %s717, %s705, 128, 128, 8
        $region56: #{gcn_forward.1} parent=31 // pred_fallthru
          _
      $region32: #{gcn_forward.1} parent=5 // pred_fallthru
        _
      %p725 = scmp.le.s32.totalorder 2, %s18
      // Predicated region
      $region57: #{gcn_forward.1} parent=5 // pred_check
        %p726 = pneg %p725
      $region58: #{gcn_forward.1} parent=5 // pred_check_branch
        %728 = sbr.rel (%p726) target = $region60
      $region59: #{gcn_forward.1} parent=5 // pred_region
        %s729 = ssub.s32 %s18, 2
        // Predicated region
        $region61: #{gcn_forward.1} parent=59 // pred_check
          %p730 = pneg %p134
        $region62: #{gcn_forward.1} parent=59 // pred_check_branch
          %732 = sbr.rel (%p730) target = $region64
        $region63: #{gcn_forward.1} parent=59 // pred_region
          %s733 = sand.u32 %s119, 1
          %s734 = scalar_lea.sflag [#allocation5], %s733
          %s735 = sand.u32 %s119, 1
          %s736 = smul.addr %s735, 128
          %s737 = scalar_lea.vmem [#allocation9], %s736
          %738 = dma.done %s734, 2048
        $region64: #{gcn_forward.1} parent=59 // pred_fallthru
          _
      $region60: #{gcn_forward.1} parent=5 // pred_fallthru
        _
    $region6: #{gcn_forward.1} parent=1 // loop_footer
      %s22 = sadd.s32 1, %s18
    $region7: #{gcn_forward.1} parent=1 // loop_footer_branch
      %17 = sbr.rel target = $region3
    $region8: #{gcn_forward.1} parent=1 // loop_exit
      _
    %739 = vsyncpa [#allocation4], 1
    %s740 = scalar_lea.sflag [#allocation4], 1
    %741 = vsyncpa %s740, 1
    %742 = vsyncpa [#allocation7], 1
    %s743 = scalar_lea.sflag [#allocation7], 1
    %744 = vsyncpa %s743, 1
    %745 = vsyncpa [#allocation5], 1
    %s746 = scalar_lea.sflag [#allocation5], 1
    %747 = vsyncpa %s746, 1

</llo_original>
